<compile_context>
chip_gen: v7x
topology: tpu7x:2x2x1
jax: 0.10.0
libtpu: 0.0.40
codegen_flags: <defaults>
</compile_context>

<pallas_src>
import jax
import jax.numpy as jnp
from jax.experimental import pallas as pl
from jax.experimental.pallas import tpu as pltpu


def _identity_copy_kernel(x_ref, o_ref):
    # LossFromK: loss = output  (pure pass-through)
    o_ref[...] = x_ref[...]


def _choose_lane_width(n, max_width=8192):
    """Largest multiple-of-128 width <= max_width that divides n (n % 128 == 0)."""
    lane = 128
    for k in range(max_width // lane, 0, -1):
        w = lane * k
        if n % w == 0:
            return w
    return lane  # n is a multiple of 128, so this always divides


def loss_from_k(output, tmp_targets=None, *, target_block_bytes=4 << 20):
    """Pallas equivalent of LossFromK.forward(output, tmp_targets) -> output."""
    del tmp_targets  # unused by the reference module

    orig_shape = output.shape
    dtype = output.dtype
    total = output.size
    if total == 0:
        # 0-sized tensor: identity, nothing to copy (guards grid=(0,)).
        return output

    itemsize = jnp.dtype(dtype).itemsize
    lane = 128

    flat = output.reshape(-1)

    # Pad only if the flat length is not already a multiple of 128 (rare); the
    # common NCHW case goes through pad-free (no extra HBM passes).
    padded_total = pl.cdiv(total, lane) * lane
    needs_pad = padded_total != total
    if needs_pad:
        flat = jnp.pad(flat, (0, padded_total - total))

    # Lane-dense slab: wide last dim (multiple of 128, divides the flat length)
    # -> few, large DMAs and unmasked wide stores.
    width = _choose_lane_width(padded_total)
    rows = padded_total // width

    # Sublane tile: as many rows as fit in ~target_block_bytes, rounded to a
    # multiple of 32 so f32 / bf16 / int8 all hit native sublane tiling.
    rows_per_block = max(1, target_block_bytes // (width * itemsize))
    if rows_per_block >= rows:
        block_rows = rows  # block == full array dims -> always legal
    else:
        block_rows = min(rows, max(32, (rows_per_block // 32) * 32))

    grid = (pl.cdiv(rows, block_rows),)
    x2d = flat.reshape(rows, width)

    out2d = pl.pallas_call(
        _identity_copy_kernel,
        out_shape=jax.ShapeDtypeStruct((rows, width), dtype),
        grid_spec=pltpu.PrefetchScalarGridSpec(
            num_scalar_prefetch=0,
            grid=grid,
            in_specs=[pl.BlockSpec((block_rows, width), lambda i: (i, 0))],
            out_specs=pl.BlockSpec((block_rows, width), lambda i: (i, 0)),
        ),
        compiler_params=pltpu.CompilerParams(
            dimension_semantics=("parallel",),
            vmem_limit_bytes=32 << 20,
        ),
        cost_estimate=pl.CostEstimate(
            flops=0,
            transcendentals=0,
            bytes_accessed=2 * total * itemsize,
        ),
    )(x2d)

    out_flat = out2d.reshape(-1)
    if needs_pad:
        out_flat = out_flat[:total]
    return out_flat.reshape(orig_shape)


if __name__ == "__main__":
    key = jax.random.PRNGKey(0)
    k1, k2, k3, k4 = jax.random.split(key, 4)

    # Small shapes consistent with an NCHW "output" and arbitrary targets.
    output = jax.random.normal(k1, (2, 4, 16, 16), dtype=jnp.float32)
    tmp_targets = jax.random.randint(k2, (2,), 0, 4)

    loss = loss_from_k(output, tmp_targets)
    loss = jax.block_until_ready(loss)
    assert loss.shape == output.shape and loss.dtype == output.dtype
    assert bool(jnp.all(loss == output))

    # Ragged / non-128-multiple size (exercises the pad fallback path).
    out_ragged = jax.random.normal(k3, (3, 5, 7), dtype=jnp.float32)
    loss_ragged = jax.block_until_ready(loss_from_k(out_ragged, tmp_targets))
    assert loss_ragged.shape == out_ragged.shape
    assert bool(jnp.all(loss_ragged == out_ragged))

    # bf16 path (dtype-aware sublane tiling).
    out_bf16 = jax.random.normal(k4, (2, 8, 8, 16), dtype=jnp.bfloat16)
    loss_bf16 = jax.block_until_ready(loss_from_k(out_bf16, tmp_targets))
    assert loss_bf16.dtype == jnp.bfloat16
    assert bool(jnp.all(loss_bf16 == out_bf16))

    print("KERNEL_OK")
</pallas_src>

<mosaic_0001>
module attributes {stable_mosaic.version = 11 : i64} {
  func.func @_identity_copy_kernel(%arg0: i32, %arg1: memref<1x2048xf32, #tpu.memory_space<vmem>>, %arg2: memref<1x2048xf32, #tpu.memory_space<vmem>>) attributes {dimension_semantics = [#tpu.dimension_semantics<parallel>], iteration_bounds = array<i64: 1>, scalar_prefetch = 0 : i64, scratch_operands = 0 : i64, tpu.core_type = #tpu.core_type<tc>, window_params = [{transform_indices = @transform_0, window_bounds = array<i64: 1, 2048>}, {transform_indices = @transform_1, window_bounds = array<i64: 1, 2048>}]} {
    %c0 = arith.constant 0 : index
    %c0_0 = arith.constant 0 : index
    %0 = vector.load %arg1[%c0, %c0_0] : memref<1x2048xf32, #tpu.memory_space<vmem>>, vector<1x2048xf32>
    %c0_1 = arith.constant 0 : index
    %c0_2 = arith.constant 0 : index
    %1 = vector.load %arg2[%c0_1, %c0_2] : memref<1x2048xf32, #tpu.memory_space<vmem>>, vector<1x2048xf32>
    tpu.vector_store %arg2[%c0_1, %c0_2], %0 {strides = array<i32>} : memref<1x2048xf32, #tpu.memory_space<vmem>>, vector<1x2048xf32>,
    return
  }
  func.func @transform_0(%arg0: i32) -> (i32, i32) {
    %c0_i32 = arith.constant 0 : i32
    %c0_i32_0 = arith.constant 0 : i32
    return %arg0, %c0_i32 : i32, i32
  }
  func.func @transform_1(%arg0: i32) -> (i32, i32) {
    %c0_i32 = arith.constant 0 : i32
    %c0_i32_0 = arith.constant 0 : i32
    return %arg0, %c0_i32 : i32, i32
  }
}

</mosaic_0001>

<llo_original>
// kernel: tpu_custom_call.1
$region0: #{tpu_custom_call.1}
  #allocation0 [shape = 'u32[]', space=smem, size = 0x4, offset = 0x4, fixed_abs, tag = 'smem constant byte address 0x4 - core index']
  #allocation1 [shape = 'u32[144,128]{1,0:T(1,128)}', space=vmem, size = 0x12000, scoped, tag = 'internal scratch']
  %s0 = inlined_call_operand.hbm [shape: f32[1,2048], index: 0, kind: input, shape index: {}]
  %s1 = inlined_call_operand.hbm [shape: f32[1,2048], index: 1, kind: output, shape index: {}]
  %s2 = sld [smem:[#allocation0]]
  $region18: #{tpu_custom_call.1} parent=0
    _
  %s4 = ssub.s32 1, %s2
  %s5 = scalar_select 0, %s4, %s2
  $region1: #{tpu_custom_call.1} parent=0
    #allocation2 [shape = 'u8[8192]{0}', space=vmem, size = 0x2000, scoped, tag = 'input window, operand 0, single buffered']
    #allocation3 [shape = 's32[1]{0}', space=sflag, size = 0x4, scoped, tag = 'scoped memory for tpu_custom_call.1']
    #allocation4 [shape = 's32[1]{0}', space=sflag, size = 0x4, scoped, tag = 'scoped memory for tpu_custom_call.1']
    #allocation5 [shape = 'u8[8192]{0}', space=vmem, size = 0x2000, scoped, tag = 'output window, operand 0, single buffered']
    %6 = vsyncpa [#allocation3], 0
    %7 = vsyncpa [#allocation4], 0
    // Predicated region
    $region2: #{tpu_custom_call.1} parent=1 // pred_check
      _
    $region3: #{tpu_custom_call.1} parent=1 // pred_check_branch
      %9 = sbr.rel (0) target = $region5
    $region4: #{tpu_custom_call.1} parent=1 // pred_region
      %s11 = ssub.s32 256, 256
      %12 = vsyncadd [#allocation3], %s11
      %s14 = sshll.u32 [#allocation2], 4
      %s15 = int_to_ptr.vmem [resolvable:$true] %s14
      %17 = dma.hbm_to_vmem [thread:$0]  %s0, 256, %s15, [#allocation3]
    $region5: #{tpu_custom_call.1} parent=1 // pred_fallthru
      _
    // Predicated region
    $region6: #{tpu_custom_call.1} parent=1 // pred_check
      _
    $region7: #{tpu_custom_call.1} parent=1 // pred_check_branch
      %19 = sbr.rel (0) target = $region9
    $region8: #{tpu_custom_call.1} parent=1 // pred_region
      %20 = dma.done [#allocation3], 256
    $region9: #{tpu_custom_call.1} parent=1 // pred_fallthru
      _
    %v21 = vld [vmem:[#allocation2] sm:$0xff]
    %v22 = vld [vmem:[#allocation2 + $0x8] sm:$0xff]
    %23 = vst [vmem:[#allocation5] sm:$0xff] %v21
    %24 = vst [vmem:[#allocation5 + $0x8] sm:$0xff] %v22
    // Predicated region
    $region10: #{tpu_custom_call.1} parent=1 // pred_check
      _
    $region11: #{tpu_custom_call.1} parent=1 // pred_check_branch
      %26 = sbr.rel (0) target = $region13
    $region12: #{tpu_custom_call.1} parent=1 // pred_region
      %s28 = ssub.s32 256, 256
      %29 = vsyncadd [#allocation4], %s28
      %s31 = sshll.u32 [#allocation5], 4
      %s32 = int_to_ptr.vmem [resolvable:$true] %s31
      %34 = dma.vmem_to_hbm [thread:$0]  %s32, 256, %s1, [#allocation4]
    $region13: #{tpu_custom_call.1} parent=1 // pred_fallthru
      _
    // Predicated region
    $region14: #{tpu_custom_call.1} parent=1 // pred_check
      _
    $region15: #{tpu_custom_call.1} parent=1 // pred_check_branch
      %36 = sbr.rel (0) target = $region17
    $region16: #{tpu_custom_call.1} parent=1 // pred_region
      %37 = dma.done [#allocation4], 256
    $region17: #{tpu_custom_call.1} parent=1 // pred_fallthru
      _
    %38 = vsyncpa [#allocation3], 1
    %39 = vsyncpa [#allocation4], 1

</llo_original>
